<compile_context>
chip_gen: v7x
topology: tpu7x:2x2x1
jax: 0.10.0
libtpu: 0.0.40
codegen_flags: <defaults>
</compile_context>

<pallas_src>
import jax
import jax.numpy as jnp
from jax.experimental import pallas as pl
from jax.experimental.pallas import tpu as pltpu

M, N, Q = 8, 128, 8  # small, consistent, lane-dense (N multiple of 128, Q of 8)


def model_kernel(in3_ref, in2_ref, out_ref):
    # Live path only: 2 * (input3 @ input2).
    # Dead path of the original forward (mm(input1,input4), mm(input4,input2),
    # add) is eliminated; its operands never enter the kernel.
    t = jnp.dot(in3_ref[...], in2_ref[...], preferred_element_type=jnp.float32)
    out_ref[...] = (t * 2.0).astype(out_ref.dtype)


def model_forward(input1, input2, input3, input4, *, use_bf16_operands=False):
    # input1 / input4 only feed results that are overwritten -> drop them.
    del input1, input4

    q, k = input3.shape
    k2, n = input2.shape
    assert k == k2, "inner dims of input3 @ input2 must match"

    lhs, rhs = input3, input2
    if use_bf16_operands:
        # Halves operand DMA and uses the native single-pass MXU dtype.
        # Numerics change (~1e-2 rel) vs the f32 PyTorch reference.
        lhs = lhs.astype(jnp.bfloat16)
        rhs = rhs.astype(jnp.bfloat16)

    bytes_accessed = (
        lhs.size * lhs.dtype.itemsize
        + rhs.size * rhs.dtype.itemsize
        + q * n * 4  # f32 output
    )

    return pl.pallas_call(
        model_kernel,
        out_shape=jax.ShapeDtypeStruct((q, n), jnp.float32),
        in_specs=[
            pl.BlockSpec(memory_space=pltpu.MemorySpace.VMEM),  # input3 (LHS)
            pl.BlockSpec(memory_space=pltpu.MemorySpace.VMEM),  # input2 (RHS)
        ],
        out_specs=pl.BlockSpec(memory_space=pltpu.MemorySpace.VMEM),
        cost_estimate=pl.CostEstimate(
            flops=2 * q * k * n,
            transcendentals=0,
            bytes_accessed=bytes_accessed,
        ),
    )(lhs, rhs)


if __name__ == "__main__":
    key = jax.random.PRNGKey(0)
    k1, k2, k3, k4 = jax.random.split(key, 4)
    input1 = jax.random.normal(k1, (M, M), dtype=jnp.float32)
    input2 = jax.random.normal(k2, (N, N), dtype=jnp.float32)
    input3 = jax.random.normal(k3, (Q, N), dtype=jnp.float32)
    input4 = jax.random.normal(k4, (M, N), dtype=jnp.float32)

    out = model_forward(input1, input2, input3, input4)  # f32 path (faithful)
    out = jax.block_until_ready(out)

    # pure-JAX reference of the live path: 2 * (input3 @ input2)
    ref = 2.0 * (input3 @ input2)
    assert out.shape == (Q, N)
    assert jnp.allclose(out, ref, atol=1e-5, rtol=1e-5)
    print("KERNEL_OK")
</pallas_src>

<mosaic_0001>
module attributes {stable_mosaic.version = 11 : i64} {
  func.func @model_kernel(%arg0: memref<8x128xf32, #tpu.memory_space<vmem>>, %arg1: memref<128x128xf32, #tpu.memory_space<vmem>>, %arg2: memref<8x128xf32, #tpu.memory_space<vmem>>) attributes {dimension_semantics = [], scalar_prefetch = 0 : i64, scratch_operands = 0 : i64, tpu.core_type = #tpu.core_type<tc>} {
    %c0 = arith.constant 0 : index
    %c0_0 = arith.constant 0 : index
    %0 = vector.load %arg0[%c0, %c0_0] : memref<8x128xf32, #tpu.memory_space<vmem>>, vector<8x128xf32>
    %c0_1 = arith.constant 0 : index
    %c0_2 = arith.constant 0 : index
    %1 = vector.load %arg1[%c0_1, %c0_2] : memref<128x128xf32, #tpu.memory_space<vmem>>, vector<128x128xf32>
    %cst = arith.constant dense<0.000000e+00> : vector<8x128xf32>
    %2 = tpu.matmul %0, %1, %cst {dimension_numbers = #tpu.dot_dimension_numbers<[1], [0], [0], [1], [0, 0, 1, 1], [], []>} : vector<8x128xf32>, vector<128x128xf32>, vector<8x128xf32> -> vector<8x128xf32>
    %cst_3 = arith.constant 2.000000e+00 : f32
    %3 = vector.broadcast %cst_3 : f32 to vector<8x128xf32>
    %4 = arith.mulf %2, %3 : vector<8x128xf32>
    %c0_4 = arith.constant 0 : index
    %c0_5 = arith.constant 0 : index
    %5 = vector.load %arg2[%c0_4, %c0_5] : memref<8x128xf32, #tpu.memory_space<vmem>>, vector<8x128xf32>
    tpu.vector_store %arg2[%c0_4, %c0_5], %4 {strides = array<i32>} : memref<8x128xf32, #tpu.memory_space<vmem>>, vector<8x128xf32>,
    return
  }
}

</mosaic_0001>

<llo_original>
// kernel: tpu_custom_call.1
$region0: #{tpu_custom_call.1}
  #allocation0 [shape = 'u32[]', space=smem, size = 0x4, offset = 0x4, fixed_abs, tag = 'smem constant byte address 0x4 - core index']
  #allocation1 [shape = 'u32[144,128]{1,0:T(1,128)}', space=vmem, size = 0x12000, scoped, tag = 'internal scratch']
  %s0 = inlined_call_operand.hbm [shape: f32[8,128], index: 0, kind: input, shape index: {}]
  %s1 = inlined_call_operand.hbm [shape: f32[128,128], index: 1, kind: input, shape index: {}]
  %s2 = inlined_call_operand.hbm [shape: f32[8,128], index: 2, kind: output, shape index: {}]
  %s3 = sld [smem:[#allocation0]]
  $region26: #{tpu_custom_call.1} parent=0
    _
  %s5 = ssub.s32 1, %s3
  %s6 = scalar_select 0, %s5, %s3
  $region1: #{tpu_custom_call.1} parent=0
    #allocation2 [shape = 'u8[4096]{0}', space=vmem, size = 0x1000, scoped, tag = 'input window, operand 0, single buffered']
    #allocation3 [shape = 's32[1]{0}', space=sflag, size = 0x4, scoped, tag = 'scoped memory for tpu_custom_call.1']
    #allocation4 [shape = 's32[1]{0}', space=sflag, size = 0x4, scoped, tag = 'scoped memory for tpu_custom_call.1']
    #allocation5 [shape = 'u8[65536]{0}', space=vmem, size = 0x10000, scoped, tag = 'input window, operand 1, single buffered']
    #allocation6 [shape = 's32[1]{0}', space=sflag, size = 0x4, scoped, tag = 'scoped memory for tpu_custom_call.1']
    #allocation7 [shape = 'u8[4096]{0}', space=vmem, size = 0x1000, scoped, tag = 'output window, operand 0, single buffered']
    %7 = vsyncpa [#allocation3], 0
    %8 = vsyncpa [#allocation6], 0
    %9 = vsyncpa [#allocation4], 0
    // Predicated region
    $region2: #{tpu_custom_call.1} parent=1 // pred_check
      _
    $region3: #{tpu_custom_call.1} parent=1 // pred_check_branch
      %11 = sbr.rel (0) target = $region5
    $region4: #{tpu_custom_call.1} parent=1 // pred_region
      %s13 = ssub.s32 128, 128
      %14 = vsyncadd [#allocation3], %s13
      %s16 = sshll.u32 [#allocation2], 4
      %s17 = int_to_ptr.vmem [resolvable:$true] %s16
      %19 = dma.hbm_to_vmem [thread:$0]  %s0, 128, %s17, [#allocation3]
    $region5: #{tpu_custom_call.1} parent=1 // pred_fallthru
      _
    // Predicated region
    $region6: #{tpu_custom_call.1} parent=1 // pred_check
      _
    $region7: #{tpu_custom_call.1} parent=1 // pred_check_branch
      %21 = sbr.rel (0) target = $region9
    $region8: #{tpu_custom_call.1} parent=1 // pred_region
      %s23 = ssub.s32 2048, 2048
      %24 = vsyncadd [#allocation6], %s23
      %s25 = sshll.u32 [#allocation5], 4
      %s26 = int_to_ptr.vmem [resolvable:$true] %s25
      %31 = dma.hbm_to_vmem [thread:$0]  %s1, 2048, %s26, [#allocation6], 128, 128, 8
    $region9: #{tpu_custom_call.1} parent=1 // pred_fallthru
      _
    // Predicated region
    $region10: #{tpu_custom_call.1} parent=1 // pred_check
      _
    $region11: #{tpu_custom_call.1} parent=1 // pred_check_branch
      %33 = sbr.rel (0) target = $region13
    $region12: #{tpu_custom_call.1} parent=1 // pred_region
      %34 = dma.done [#allocation3], 128
    $region13: #{tpu_custom_call.1} parent=1 // pred_fallthru
      _
    // Predicated region
    $region14: #{tpu_custom_call.1} parent=1 // pred_check
      _
    $region15: #{tpu_custom_call.1} parent=1 // pred_check_branch
      %36 = sbr.rel (0) target = $region17
    $region16: #{tpu_custom_call.1} parent=1 // pred_region
      %37 = dma.done [#allocation6], 2048
    $region17: #{tpu_custom_call.1} parent=1 // pred_fallthru
      _
    %v38 = vld [vmem:[#allocation2] sm:$0xff]
    %v39 = vld [vmem:[#allocation5] sm:$0xff]
    %v40 = vld [vmem:[#allocation5 + $0x8] sm:$0xff]
    %v41 = vld [vmem:[#allocation5 + $0x10] sm:$0xff]
    %v42 = vld [vmem:[#allocation5 + $0x18] sm:$0xff]
    %v43 = vld [vmem:[#allocation5 + $0x20] sm:$0xff]
    %v44 = vld [vmem:[#allocation5 + $0x28] sm:$0xff]
    %v45 = vld [vmem:[#allocation5 + $0x30] sm:$0xff]
    %v46 = vld [vmem:[#allocation5 + $0x38] sm:$0xff]
    %v47 = vld [vmem:[#allocation5 + $0x40] sm:$0xff]
    %v48 = vld [vmem:[#allocation5 + $0x48] sm:$0xff]
    %v49 = vld [vmem:[#allocation5 + $0x50] sm:$0xff]
    %v50 = vld [vmem:[#allocation5 + $0x58] sm:$0xff]
    %v51 = vld [vmem:[#allocation5 + $0x60] sm:$0xff]
    %v52 = vld [vmem:[#allocation5 + $0x68] sm:$0xff]
    %v53 = vld [vmem:[#allocation5 + $0x70] sm:$0xff]
    %v54 = vld [vmem:[#allocation5 + $0x78] sm:$0xff]
    %55 = vmatprep.subr.mxu0 0.0
    %56 = vmatpush1.msra.mxu0 %v39
    %57 = vmatprep.subr.mxu0 0.0
    %58 = vmatpush1.msra.mxu0 %v40
    %59 = vmatprep.subr.mxu0 0.0
    %60 = vmatpush1.msra.mxu0 %v41
    %61 = vmatprep.subr.mxu0 0.0
    %62 = vmatpush1.msra.mxu0 %v42
    %63 = vmatprep.subr.mxu0 0.0
    %64 = vmatpush1.msra.mxu0 %v43
    %65 = vmatprep.subr.mxu0 0.0
    %66 = vmatpush1.msra.mxu0 %v44
    %67 = vmatprep.subr.mxu0 0.0
    %68 = vmatpush1.msra.mxu0 %v45
    %69 = vmatprep.subr.mxu0 0.0
    %70 = vmatpush1.msra.mxu0 %v46
    %71 = vmatprep.subr.mxu0 0.0
    %72 = vmatpush1.msra.mxu0 %v47
    %73 = vmatprep.subr.mxu0 0.0
    %74 = vmatpush1.msra.mxu0 %v48
    %75 = vmatprep.subr.mxu0 0.0
    %76 = vmatpush1.msra.mxu0 %v49
    %77 = vmatprep.subr.mxu0 0.0
    %78 = vmatpush1.msra.mxu0 %v50
    %79 = vmatprep.subr.mxu0 0.0
    %80 = vmatpush1.msra.mxu0 %v51
    %81 = vmatprep.subr.mxu0 0.0
    %82 = vmatpush1.msra.mxu0 %v52
    %83 = vmatprep.subr.mxu0 0.0
    %84 = vmatpush1.msra.mxu0 %v53
    %85 = vmatprep.subr.mxu0 0.0
    %86 = vmatpush1.msra.mxu0 %v54
    %87 = vmatprep.subr.mxu0 0.0
    %88 = vmatpush1.msra.mxu0 0.0
    %89 = vmatprep.subr.mxu0 0.0
    %90 = vmatpush1.msra.mxu0 0.0
    %91 = vmatprep.subr.mxu0 0.0
    %92 = vmatpush1.msra.mxu0 0.0
    %93 = vmatprep.subr.mxu0 0.0
    %94 = vmatpush1.msra.mxu0 0.0
    %95 = vmatprep.subr.mxu0 0.0
    %96 = vmatpush1.msra.mxu0 0.0
    %97 = vmatprep.subr.mxu0 0.0
    %98 = vmatpush1.msra.mxu0 0.0
    %99 = vmatprep.subr.mxu0 0.0
    %100 = vmatpush1.msra.mxu0 0.0
    %101 = vmatprep.subr.mxu0 0.0
    %102 = vmatpush1.msra.mxu0 0.0
    %103 = vmatprep.subr.mxu0 0.0
    %104 = vmatpush1.msra.mxu0 0.0
    %105 = vmatprep.subr.mxu0 0.0
    %106 = vmatpush1.msra.mxu0 0.0
    %107 = vmatprep.subr.mxu0 0.0
    %108 = vmatpush1.msra.mxu0 0.0
    %109 = vmatprep.subr.mxu0 0.0
    %110 = vmatpush1.msra.mxu0 0.0
    %111 = vmatprep.subr.mxu0 0.0
    %112 = vmatpush1.msra.mxu0 0.0
    %113 = vmatprep.subr.mxu0 0.0
    %114 = vmatpush1.msra.mxu0 0.0
    %115 = vmatprep.subr.mxu0 0.0
    %116 = vmatpush1.msra.mxu0 0.0
    %117 = vmatprep.subr.mxu0 0.0
    %118 = vmatpush1.msra.mxu0 0.0
    %119 = vmatprep.mubr.f32.mxu0 0.0
    %120 = vmatmul.mubr.f32.gmra.mrb[0].mxu0 %v38
    %v121 = vpop.f32.mrb[0].mxu0
    %v122 = vadd.f32 0.0, %v121
    %v123 = vpop.f32.mrb[0].mxu0
    %124 = vdwg.mxu0
    %v125 = vmul.f32 %v122, 2.0
    %126 = vst [vmem:[#allocation7] sm:$0xff] %v125
    // Predicated region
    $region18: #{tpu_custom_call.1} parent=1 // pred_check
      _
    $region19: #{tpu_custom_call.1} parent=1 // pred_check_branch
      %128 = sbr.rel (0) target = $region21
    $region20: #{tpu_custom_call.1} parent=1 // pred_region
      %s130 = ssub.s32 128, 128
      %131 = vsyncadd [#allocation4], %s130
      %s133 = sshll.u32 [#allocation7], 4
      %s134 = int_to_ptr.vmem [resolvable:$true] %s133
      %136 = dma.vmem_to_hbm [thread:$0]  %s134, 128, %s2, [#allocation4]
    $region21: #{tpu_custom_call.1} parent=1 // pred_fallthru
      _
    // Predicated region
    $region22: #{tpu_custom_call.1} parent=1 // pred_check
      _
    $region23: #{tpu_custom_call.1} parent=1 // pred_check_branch
      %138 = sbr.rel (0) target = $region25
    $region24: #{tpu_custom_call.1} parent=1 // pred_region
      %139 = dma.done [#allocation4], 128
    $region25: #{tpu_custom_call.1} parent=1 // pred_fallthru
      _
    %140 = vsyncpa [#allocation3], 1
    %141 = vsyncpa [#allocation6], 1
    %142 = vsyncpa [#allocation4], 1

</llo_original>
